<compile_context>
chip_gen: v6e
topology: v6e:2x2x1
jax: 0.10.0
libtpu: 0.0.40
codegen_flags: <defaults>
</compile_context>

<pallas_src>
import jax
import jax.numpy as jnp
from jax import lax
from jax.experimental import pallas as pl
from jax.experimental.pallas import tpu as pltpu

LANE = 128                        # vreg lane width (last dim of every tile)
CHUNK_ROWS = 1024                 # inner unrolled slice (bounds f32 temporaries)
DOUBLE_BUF_INPUT_BYTES = 16 << 20 # 2 inputs x 2 buffers x ~4 MiB per block
SMALL_INPUT_ELEMS = 1 << 20       # below this, plain XLA beats a kernel launch


def _multi_tensorcore_chip():
    """True on chips whose 2 TensorCores share HBM (v4 megacore, v5p, v7x)."""
    try:
        kind = jax.devices()[0].device_kind.lower()
    except Exception:
        return False
    return ("v4" in kind) or ("v5p" in kind) or ("v7" in kind)


def _make_mean_diff_kernel(block_rows, acc_rows, n_blocks, bps,
                           valid_rows_last, has_oob_step):
    """Builds the reduction kernel; every parameter is a static Python value.

    block_rows       rows per input block
    acc_rows         rows of the small resident accumulator / output block
    n_blocks         number of real blocks along the row axis
    bps              blocks per split (inner grid extent)
    valid_rows_last  valid rows in the final block (== block_rows if aligned)
    has_oob_step     2-way split with odd n_blocks -> one clamped no-op step
    """
    last_block = n_blocks - 1
    ragged = valid_rows_last != block_rows
    chunk_cap = CHUNK_ROWS if acc_rows < block_rows else block_rows

    def _partial_sum(x_ref, y_ref, valid_rows):
        """Sum of (x - y) over the first `valid_rows` rows of the block,
        folded to an (acc_rows, LANE) f32 tile.  Static unrolled chunk loop;
        only the single straddling chunk (ragged block) pays any mask work."""
        acc = jnp.zeros((acc_rows, LANE), jnp.float32)
        start = 0
        while start < valid_rows:
            clen = min(chunk_cap, block_rows - start)
            d = (x_ref[pl.ds(start, clen), :].astype(jnp.float32)
                 - y_ref[pl.ds(start, clen), :].astype(jnp.float32))
            n_valid = valid_rows - start          # static
            if n_valid < clen:
                row = lax.broadcasted_iota(jnp.int32, (clen, LANE), 0)
                d = jnp.where(row < n_valid, d, 0.0)
            if clen != acc_rows:
                d = d.reshape(clen // acc_rows, acc_rows, LANE).sum(axis=0)
            acc = acc + d
            start += clen
        return acc

    def kernel(x_ref, y_ref, o_ref):
        s = pl.program_id(0)          # TensorCore split index
        i = pl.program_id(1)          # sequential reduction step
        blk = s * bps + i             # logical block index owned by this step

        @pl.when(i == 0)
        def _init():
            o_ref[...] = jnp.zeros_like(o_ref)

        if ragged:
            is_last = blk == last_block
            full_cond = jnp.logical_not(is_last)
            if has_oob_step:
                full_cond = jnp.logical_and(full_cond, blk < n_blocks)

            @pl.when(full_cond)       # hot path: full block, zero mask work
            def _full():
                o_ref[...] += _partial_sum(x_ref, y_ref, block_rows)

            @pl.when(is_last)         # exactly one step: masked ragged block
            def _last():
                o_ref[...] += _partial_sum(x_ref, y_ref, valid_rows_last)
        else:
            if has_oob_step:
                @pl.when(blk < n_blocks)
                def _body():
                    o_ref[...] += _partial_sum(x_ref, y_ref, block_rows)
            else:
                o_ref[...] += _partial_sum(x_ref, y_ref, block_rows)

    return kernel


def _mean_diff_pallas(x, y):
    total = x.size
    res_dtype = jnp.result_type(x.dtype, y.dtype)
    if not jnp.issubdtype(res_dtype, jnp.floating):
        # torch.mean is only defined for floating tensors; force f32 here.
        res_dtype = jnp.float32

    xf = x.reshape(-1)
    yf = y.reshape(-1)

    rows = total // LANE
    main = rows * LANE
    tail = total - main

    tail_sum = jnp.float32(0.0)
    if tail:
        # <=127-element remainder: tiny wrapper-side reduction instead of
        # jnp.pad (which would copy both full arrays just to lane-align them).
        tail_sum = jnp.sum(xf[main:].astype(jnp.float32)
                           - yf[main:].astype(jnp.float32))

    if rows == 0:                     # fewer than 128 elements: no kernel
        return (tail_sum / jnp.float32(total)).astype(res_dtype)

    x2 = (xf if tail == 0 else xf[:main]).reshape(rows, LANE)
    y2 = (yf if tail == 0 else yf[:main]).reshape(rows, LANE)

    # ---- tile selection: ~4 MiB (f32-equivalent) per input per buffer ----
    itemsum = x.dtype.itemsize + y.dtype.itemsize
    cap = DOUBLE_BUF_INPUT_BYTES // (2 * LANE * itemsum)
    cap = max(8, (cap // 8) * 8)
    block_rows = rows if rows <= cap else cap
    n_blocks = -(-rows // block_rows)

    acc_rows = 8 if block_rows % 8 == 0 else block_rows   # small accumulator
    valid_rows_last = rows - (n_blocks - 1) * block_rows

    # ---- 2-way split of the reduction range (multi-TensorCore chips only) --
    if n_blocks >= 2 and _multi_tensorcore_chip():
        num_splits = 2
        bps = -(-n_blocks // 2)
        has_oob_step = (2 * bps) != n_blocks
    else:
        num_splits = 1
        bps = n_blocks
        has_oob_step = False

    if has_oob_step:
        # Clamp the DMA for split 1's single overhanging step; the kernel
        # skips its accumulation entirely.
        in_index_map = lambda s, i: (jnp.minimum(s * bps + i, n_blocks - 1), 0)
    else:
        in_index_map = lambda s, i: (s * bps + i, 0)

    kernel = _make_mean_diff_kernel(block_rows, acc_rows, n_blocks, bps,
                                    valid_rows_last, has_oob_step)

    # ---- explicit VMEM budget (covers v5e's 16 MiB default scoped limit,
    #      stays well under v7x's 64 MiB physical per-core VMEM) -------------
    in_bytes = 2 * block_rows * LANE * itemsum                 # double-buffered inputs
    tmp_bytes = 2 * min(CHUNK_ROWS, block_rows) * LANE * 4     # bounded f32 temps
    out_bytes = 2 * num_splits * acc_rows * LANE * 4
    vmem_limit = int(min(max(in_bytes + tmp_bytes + out_bytes + (4 << 20),
                             24 << 20),
                         48 << 20))

    partials = pl.pallas_call(
        kernel,
        out_shape=jax.ShapeDtypeStruct((num_splits, acc_rows, LANE),
                                       jnp.float32),
        grid_spec=pltpu.PrefetchScalarGridSpec(
            num_scalar_prefetch=0,
            grid=(num_splits, bps),
            in_specs=[
                pl.BlockSpec((block_rows, LANE), in_index_map),
                pl.BlockSpec((block_rows, LANE), in_index_map),
            ],
            out_specs=pl.BlockSpec((None, acc_rows, LANE),
                                   lambda s, i: (s, 0, 0)),
        ),
        compiler_params=pltpu.CompilerParams(
            dimension_semantics=("parallel", "arbitrary"),
            vmem_limit_bytes=vmem_limit,
        ),
    )(x2, y2)

    mean = (jnp.sum(partials) + tail_sum) / jnp.float32(total)
    return mean.astype(res_dtype)


def my_loss(x, y, *, force_pallas=False):
    """Pallas equivalent of My_loss().forward(x, y) == mean(x - y)."""
    assert x.shape == y.shape, "x and y must have identical shapes here"
    if x.size < SMALL_INPUT_ELEMS and not force_pallas:
        # Kernel launch + layout plumbing dominates at tiny sizes; the fused
        # XLA reduction is already optimal there.
        res_dtype = jnp.result_type(x.dtype, y.dtype)
        if not jnp.issubdtype(res_dtype, jnp.floating):
            res_dtype = jnp.float32
        return jnp.mean(x.astype(jnp.float32) -
                        y.astype(jnp.float32)).astype(res_dtype)
    return _mean_diff_pallas(x, y)


if __name__ == "__main__":
    key = jax.random.PRNGKey(0)
    kx, ky = jax.random.split(key)
    # NCHW-style small shapes consistent with a typical loss input
    x = jax.random.normal(kx, (2, 4, 16, 16), dtype=jnp.float32)
    y = jax.random.normal(ky, (2, 4, 16, 16), dtype=jnp.float32)

    out = my_loss(x, y, force_pallas=True)   # exercise the Pallas kernel
    jax.block_until_ready(out)

    # sanity check against plain JAX reference
    ref = jnp.mean(x - y)
    assert jnp.allclose(out, ref, atol=1e-5, rtol=1e-5), (out, ref)

    print("KERNEL_OK")
</pallas_src>

<mosaic_0001>
module attributes {stable_mosaic.version = 11 : i64} {
  func.func @kernel(%arg0: i32, %arg1: i32, %arg2: memref<16x128xf32, #tpu.memory_space<vmem>>, %arg3: memref<16x128xf32, #tpu.memory_space<vmem>>, %arg4: memref<1x8x128xf32, #tpu.memory_space<vmem>>) attributes {dimension_semantics = [#tpu.dimension_semantics<parallel>, #tpu.dimension_semantics<arbitrary>], iteration_bounds = array<i64: 1, 1>, scalar_prefetch = 0 : i64, scratch_operands = 0 : i64, tpu.core_type = #tpu.core_type<tc>, window_params = [{transform_indices = @transform_0, window_bounds = array<i64: 16, 128>}, {transform_indices = @transform_1, window_bounds = array<i64: 16, 128>}, {transform_indices = @transform_2, window_bounds = array<i64: 1, 8, 128>}]} {
    %c0_i32 = arith.constant 0 : i32
    %0 = arith.cmpi eq, %arg1, %c0_i32 : i32
    %1 = arith.extui %0 : i1 to i32
    %c0_i32_0 = arith.constant 0 : i32
    %2 = arith.cmpi ne, %1, %c0_i32_0 : i32
    scf.if %2 {
      %cst_11 = arith.constant 0.000000e+00 : f32
      %16 = vector.broadcast %cst_11 : f32 to vector<8x128xf32>
      %c0_12 = arith.constant 0 : index
      %c0_13 = arith.constant 0 : index
      %c0_14 = arith.constant 0 : index
      %17 = vector.load %arg4[%c0_12, %c0_13, %c0_14] : memref<1x8x128xf32, #tpu.memory_space<vmem>>, vector<1x8x128xf32>
      %18 = vector.shape_cast %17 : vector<1x8x128xf32> to vector<8x128xf32>
      %19 = vector.shape_cast %16 : vector<8x128xf32> to vector<1x8x128xf32>
      tpu.vector_store %arg4[%c0_12, %c0_13, %c0_14], %19 {strides = array<i32>} : memref<1x8x128xf32, #tpu.memory_space<vmem>>, vector<1x8x128xf32>,
    } else {
    }
    %c0 = arith.constant 0 : index
    %c0_1 = arith.constant 0 : index
    %c0_2 = arith.constant 0 : index
    %3 = vector.load %arg4[%c0, %c0_1, %c0_2] : memref<1x8x128xf32, #tpu.memory_space<vmem>>, vector<1x8x128xf32>
    %4 = vector.shape_cast %3 : vector<1x8x128xf32> to vector<8x128xf32>
    %cst = arith.constant 0.000000e+00 : f32
    %5 = vector.broadcast %cst : f32 to vector<8x128xf32>
    %c0_3 = arith.constant 0 : index
    %c0_4 = arith.constant 0 : index
    %6 = vector.load %arg2[%c0_3, %c0_4] : memref<16x128xf32, #tpu.memory_space<vmem>>, vector<16x128xf32>
    %c0_5 = arith.constant 0 : index
    %c0_6 = arith.constant 0 : index
    %7 = vector.load %arg3[%c0_5, %c0_6] : memref<16x128xf32, #tpu.memory_space<vmem>>, vector<16x128xf32>
    %8 = arith.subf %6, %7 : vector<16x128xf32>
    %9 = vector.shape_cast %8 : vector<16x128xf32> to vector<2x8x128xf32>
    %cst_7 = arith.constant dense<0.000000e+00> : vector<8x128xf32>
    %10 = vector.multi_reduction <add>, %9, %cst_7 [0] : vector<2x8x128xf32> to vector<8x128xf32>
    %11 = arith.addf %5, %10 : vector<8x128xf32>
    %12 = arith.addf %4, %11 : vector<8x128xf32>
    %c0_8 = arith.constant 0 : index
    %c0_9 = arith.constant 0 : index
    %c0_10 = arith.constant 0 : index
    %13 = vector.load %arg4[%c0_8, %c0_9, %c0_10] : memref<1x8x128xf32, #tpu.memory_space<vmem>>, vector<1x8x128xf32>
    %14 = vector.shape_cast %13 : vector<1x8x128xf32> to vector<8x128xf32>
    %15 = vector.shape_cast %12 : vector<8x128xf32> to vector<1x8x128xf32>
    tpu.vector_store %arg4[%c0_8, %c0_9, %c0_10], %15 {strides = array<i32>} : memref<1x8x128xf32, #tpu.memory_space<vmem>>, vector<1x8x128xf32>,
    return
  }
  func.func @transform_0(%arg0: i32, %arg1: i32) -> (i32, i32) {
    %c1_i32 = arith.constant 1 : i32
    %0 = arith.muli %arg0, %c1_i32 : i32
    %1 = arith.addi %0, %arg1 : i32
    %c0_i32 = arith.constant 0 : i32
    %c0_i32_0 = arith.constant 0 : i32
    return %1, %c0_i32 : i32, i32
  }
  func.func @transform_1(%arg0: i32, %arg1: i32) -> (i32, i32) {
    %c1_i32 = arith.constant 1 : i32
    %0 = arith.muli %arg0, %c1_i32 : i32
    %1 = arith.addi %0, %arg1 : i32
    %c0_i32 = arith.constant 0 : i32
    %c0_i32_0 = arith.constant 0 : i32
    return %1, %c0_i32 : i32, i32
  }
  func.func @transform_2(%arg0: i32, %arg1: i32) -> (i32, i32, i32) {
    %c0_i32 = arith.constant 0 : i32
    %c0_i32_0 = arith.constant 0 : i32
    %c0_i32_1 = arith.constant 0 : i32
    return %arg0, %c0_i32, %c0_i32_0 : i32, i32, i32
  }
}

</mosaic_0001>

<llo_original>
// kernel: tpu_custom_call.1
$region0: #{tpu_custom_call.1}
  #allocation0 [shape = 'u32[]', space=smem, size = 0x4, offset = 0x4, fixed_abs, tag = 'smem constant byte address 0x4 - core index']
  #allocation1 [shape = 'u32[144,128]{1,0:T(1,128)}', space=vmem, size = 0x12000, scoped, tag = 'internal scratch']
  %s0 = inlined_call_operand.hbm [shape: f32[16,128], index: 0, kind: input, shape index: {}]
  %s1 = inlined_call_operand.hbm [shape: f32[16,128], index: 1, kind: input, shape index: {}]
  %s2 = inlined_call_operand.hbm [shape: f32[1,8,128], index: 2, kind: output, shape index: {}]
  %s3 = sld [smem:[#allocation0]]
  $region30: #{tpu_custom_call.1} parent=0
    _
  %s5 = ssub.s32 1, %s3
  %s6 = scalar_select 0, %s5, %s3
  $region1: #{tpu_custom_call.1} parent=0
    #allocation2 [shape = 'u8[8192]{0}', space=vmem, size = 0x2000, scoped, tag = 'input window, operand 0, single buffered']
    #allocation3 [shape = 's32[1]{0}', space=sflag, size = 0x4, scoped, tag = 'scoped memory for tpu_custom_call.1']
    #allocation4 [shape = 's32[1]{0}', space=sflag, size = 0x4, scoped, tag = 'scoped memory for tpu_custom_call.1']
    #allocation5 [shape = 'u8[8192]{0}', space=vmem, size = 0x2000, scoped, tag = 'input window, operand 1, single buffered']
    #allocation6 [shape = 's32[1]{0}', space=sflag, size = 0x4, scoped, tag = 'scoped memory for tpu_custom_call.1']
    #allocation7 [shape = 'u8[4096]{0}', space=vmem, size = 0x1000, scoped, tag = 'output window, operand 0, single buffered']
    %7 = vsyncpa [#allocation3], 0
    %8 = vsyncpa [#allocation6], 0
    %9 = vsyncpa [#allocation4], 0
    // Predicated region
    $region2: #{tpu_custom_call.1} parent=1 // pred_check
      _
    $region3: #{tpu_custom_call.1} parent=1 // pred_check_branch
      %11 = sbr.rel (0) target = $region5
    $region4: #{tpu_custom_call.1} parent=1 // pred_region
      %s12 = sadd.s32 0, 0
      %s13 = smul.u32 2, %s12
      %s15 = ssub.s32 256, 256
      %16 = vsyncadd [#allocation3], %s15
      %s17 = smul.addr %s13, 128
      %s18 = scalar_lea.hbm %s0, %s17
      %s19 = sshll.u32 [#allocation2], 4
      %s20 = int_to_ptr.vmem [resolvable:$true] %s19
      %25 = dma.hbm_to_vmem [thread:$0]  %s18, 256, %s20, [#allocation3], 128, 128, 8
    $region5: #{tpu_custom_call.1} parent=1 // pred_fallthru
      _
    // Predicated region
    $region6: #{tpu_custom_call.1} parent=1 // pred_check
      _
    $region7: #{tpu_custom_call.1} parent=1 // pred_check_branch
      %27 = sbr.rel (0) target = $region9
    $region8: #{tpu_custom_call.1} parent=1 // pred_region
      %s28 = sadd.s32 0, 0
      %s29 = smul.u32 2, %s28
      %s31 = ssub.s32 256, 256
      %32 = vsyncadd [#allocation6], %s31
      %s33 = smul.addr %s29, 128
      %s34 = scalar_lea.hbm %s1, %s33
      %s35 = sshll.u32 [#allocation5], 4
      %s36 = int_to_ptr.vmem [resolvable:$true] %s35
      %41 = dma.hbm_to_vmem [thread:$0]  %s34, 256, %s36, [#allocation6], 128, 128, 8
    $region9: #{tpu_custom_call.1} parent=1 // pred_fallthru
      _
    // Predicated region
    $region10: #{tpu_custom_call.1} parent=1 // pred_check
      _
    $region11: #{tpu_custom_call.1} parent=1 // pred_check_branch
      %43 = sbr.rel (0) target = $region13
    $region12: #{tpu_custom_call.1} parent=1 // pred_region
      %44 = dma.done [#allocation3], 256
    $region13: #{tpu_custom_call.1} parent=1 // pred_fallthru
      _
    // Predicated region
    $region14: #{tpu_custom_call.1} parent=1 // pred_check
      _
    $region15: #{tpu_custom_call.1} parent=1 // pred_check_branch
      %46 = sbr.rel (0) target = $region17
    $region16: #{tpu_custom_call.1} parent=1 // pred_region
      %47 = dma.done [#allocation6], 256
    $region17: #{tpu_custom_call.1} parent=1 // pred_fallthru
      _
    %s48 = sadd.s32 0, 0
    %s49 = smul.u32 2, %s48
    %s50 = sadd.s32 0, 0
    %s51 = smul.u32 2, %s50
    %p52 = scmp.eq.s32.totalorder 0, 0
    // Predicated region
    $region18: #{tpu_custom_call.1} parent=1 // pred_check
      %p53 = pneg %p52
    $region19: #{tpu_custom_call.1} parent=1 // pred_check_branch
      %55 = sbr.rel (%p53) target = $region21
    $region20: #{tpu_custom_call.1} parent=1 // pred_region
      %56 = vst [vmem:[#allocation7] sm:$0xff] 0.0
    $region21: #{tpu_custom_call.1} parent=1 // pred_fallthru
      _
    %v57 = vld [vmem:[#allocation7] sm:$0xff]
    %v58 = vld [vmem:[#allocation2] sm:$0xff]
    %v59 = vld [vmem:[#allocation2 + $0x8] sm:$0xff]
    %v60 = vld [vmem:[#allocation5] sm:$0xff]
    %v61 = vld [vmem:[#allocation5 + $0x8] sm:$0xff]
    %v62 = vsub.f32 %v58, %v60
    %v63 = vsub.f32 %v59, %v61
    %v64 = vadd.f32 %v62, %v63
    %v65 = vadd.f32 %v64, 0.0
    %v66 = vadd.f32 %v57, %v65
    %67 = vst [vmem:[#allocation7] sm:$0xff] %v66
    // Predicated region
    $region22: #{tpu_custom_call.1} parent=1 // pred_check
      _
    $region23: #{tpu_custom_call.1} parent=1 // pred_check_branch
      %69 = sbr.rel (0) target = $region25
    $region24: #{tpu_custom_call.1} parent=1 // pred_region
      %s71 = ssub.s32 128, 128
      %72 = vsyncadd [#allocation4], %s71
      %s74 = sshll.u32 [#allocation7], 4
      %s75 = int_to_ptr.vmem [resolvable:$true] %s74
      %77 = dma.vmem_to_hbm [thread:$0]  %s75, 128, %s2, [#allocation4]
    $region25: #{tpu_custom_call.1} parent=1 // pred_fallthru
      _
    // Predicated region
    $region26: #{tpu_custom_call.1} parent=1 // pred_check
      _
    $region27: #{tpu_custom_call.1} parent=1 // pred_check_branch
      %79 = sbr.rel (0) target = $region29
    $region28: #{tpu_custom_call.1} parent=1 // pred_region
      %80 = dma.done [#allocation4], 128
    $region29: #{tpu_custom_call.1} parent=1 // pred_fallthru
      _
    %81 = vsyncpa [#allocation3], 1
    %82 = vsyncpa [#allocation6], 1
    %83 = vsyncpa [#allocation4], 1

</llo_original>
